<compile_context>
chip_gen: v6e
topology: v6e:2x2x1
jax: 0.10.0
libtpu: 0.0.40
codegen_flags: <defaults>
</compile_context>

<pallas_src>
import functools

import jax
import jax.numpy as jnp
from jax import lax
from jax.experimental import pallas as pl
from jax.experimental.pallas import tpu as pltpu

_MIB = 1024 * 1024


def _round_up(x, m):
    return ((x + m - 1) // m) * m


def _vmem_budgets():
    """Pick (working-set budget, vmem_limit_bytes) per TPU generation.

    v5e/v6e: 128 MiB physical VMEM -> big blocks. v7x: 64 MiB -> keep headroom for
    Mosaic scratch. If the query fails we fall back to the conservative v7x-safe choice.
    """
    cap = None
    try:
        cap = int(pltpu.get_tpu_info().vmem_capacity_bytes)
    except Exception:
        cap = None
    if cap is not None and cap > 80 * _MIB:
        return 40 * _MIB, 64 * _MIB  # v5e / v6e
    return 24 * _MIB, 48 * _MIB      # v7x or unknown


def _gap_simple_kernel(x_ref, o_ref, *, inv_hw):
    # Full H*W per block: single-pass sum, no accumulator scratch, no predicated phases.
    x = x_ref[...].astype(jnp.float32)
    o_ref[...] = (jnp.sum(x, axis=-1, keepdims=True) * inv_hw).astype(o_ref.dtype)


def _gap_chunked_kernel(x_ref, o_ref, acc_ref, *, hw, tile_hw, mask_hw, inv_hw):
    # x_ref:  (tile_rows, tile_hw) input chunk
    # o_ref:  (tile_rows, 1) output block, resident across the reduction axis
    # acc_ref:(tile_rows, 1) f32 accumulator scratch
    k = pl.program_id(1)
    nk = pl.num_programs(1)

    @pl.when(k == 0)
    def _init():
        acc_ref[...] = jnp.zeros_like(acc_ref)

    if mask_hw:
        # Only the last chunk is ragged; keep every earlier chunk a plain streaming sum.
        @pl.when(k < nk - 1)
        def _body():
            acc_ref[...] += jnp.sum(
                x_ref[...].astype(jnp.float32), axis=-1, keepdims=True)

        @pl.when(k == nk - 1)
        def _body_masked():
            x = x_ref[...].astype(jnp.float32)
            col = lax.broadcasted_iota(jnp.int32, (1, x.shape[1]), 1) + k * tile_hw
            x = jnp.where(col < hw, x, 0.0)
            acc_ref[...] += jnp.sum(x, axis=-1, keepdims=True)
    else:
        acc_ref[...] += jnp.sum(
            x_ref[...].astype(jnp.float32), axis=-1, keepdims=True)

    @pl.when(k == nk - 1)
    def _finalize():
        o_ref[...] = (acc_ref[...] * inv_hw).astype(o_ref.dtype)


def global_avg_pool_2d(x, *, vmem_budget_bytes=None, vmem_limit_bytes=None):
    """x: (N, C, H, W) -> (N, C, 1, 1), mean over H*W (matches the PyTorch module)."""
    N, C, H, W = x.shape
    rows, hw = N * C, H * W
    dtype = x.dtype
    itemsize = jnp.dtype(dtype).itemsize
    # Sublane packing: 8 for f32, 16 for bf16, 32 for int8/fp8.
    sub = max(8, 8 * (4 // itemsize))

    auto_budget, auto_limit = _vmem_budgets()
    budget = auto_budget if vmem_budget_bytes is None else vmem_budget_bytes
    limit = auto_limit if vmem_limit_bytes is None else vmem_limit_bytes

    x2d = x.reshape(rows, hw)

    # VMEM accounting uses the lane-padded footprint: input rows pad to round_up(hw,128)
    # lanes, and the (tile_rows, 1) output block pads to 128 lanes. Both are
    # double-buffered by the pipeline.
    padded_hw = _round_up(hw, 128)
    out_row_bytes = 128 * itemsize
    full_per_row = 2 * padded_hw * itemsize + 2 * out_row_bytes

    if 64 * full_per_row <= budget:
        # ---- full-row path: whole H*W reduction in one grid step per row tile ----
        tile_hw = hw
        tile_rows = min(budget // full_per_row, 16384)
        tile_rows = max(sub, (tile_rows // sub) * sub)
        tile_rows = min(tile_rows, _round_up(rows, sub))

        grid = (pl.cdiv(rows, tile_rows),)
        kernel = functools.partial(_gap_simple_kernel, inv_hw=1.0 / hw)
        in_specs = [pl.BlockSpec((tile_rows, tile_hw), lambda i: (i, 0))]
        out_specs = pl.BlockSpec((tile_rows, 1), lambda i: (i, 0))
        scratch_shapes = []
        dim_sem = ("parallel",)
    else:
        # ---- chunked path (very large H*W): second (reduction) grid axis, placed last ----
        tile_rows = max(sub, (256 // sub) * sub)
        tile_rows = min(tile_rows, _round_up(rows, sub))
        # Budget leftover after the lane-padded output block (x2) and f32 acc scratch.
        fixed = tile_rows * (2 * out_row_bytes + 128 * 4)
        avail = max(budget - fixed, 2 * tile_rows * 128 * itemsize)
        tile_hw = (avail // (2 * tile_rows * itemsize)) // 128 * 128
        tile_hw = max(128, min(tile_hw, padded_hw))

        grid = (pl.cdiv(rows, tile_rows), pl.cdiv(hw, tile_hw))
        mask_hw = (hw % tile_hw) != 0  # static
        kernel = functools.partial(
            _gap_chunked_kernel, hw=hw, tile_hw=tile_hw, mask_hw=mask_hw, inv_hw=1.0 / hw)
        in_specs = [pl.BlockSpec((tile_rows, tile_hw), lambda i, k: (i, k))]
        out_specs = pl.BlockSpec((tile_rows, 1), lambda i, k: (i, 0))
        scratch_shapes = [pltpu.VMEM((tile_rows, 1), jnp.float32)]
        dim_sem = ("parallel", "arbitrary")

    out2d = pl.pallas_call(
        kernel,
        out_shape=jax.ShapeDtypeStruct((rows, 1), dtype),
        grid_spec=pltpu.PrefetchScalarGridSpec(
            num_scalar_prefetch=0,
            grid=grid,
            in_specs=in_specs,
            out_specs=out_specs,
            scratch_shapes=scratch_shapes,
        ),
        compiler_params=pltpu.CompilerParams(
            dimension_semantics=dim_sem,
            vmem_limit_bytes=limit,
        ),
        cost_estimate=pl.CostEstimate(
            flops=rows * hw,
            transcendentals=0,
            bytes_accessed=rows * hw * itemsize + rows * itemsize,
        ),
    )(x2d)

    return out2d.reshape(N, C, 1, 1)


if __name__ == "__main__":
    key = jax.random.PRNGKey(0)
    N, C, H, W = 2, 4, 16, 16
    x = jax.random.normal(key, (N, C, H, W), dtype=jnp.float32)

    out = jax.block_until_ready(global_avg_pool_2d(x))

    # Reference check (plain JAX, mirrors torch.mean over flattened H*W).
    ref = jnp.mean(x.reshape(N, C, H * W), axis=2).reshape(N, C, 1, 1)
    assert out.shape == (N, C, 1, 1), out.shape
    assert jnp.allclose(out, ref, atol=1e-5, rtol=1e-5), "mismatch vs reference"

    print("KERNEL_OK")
</pallas_src>

<mosaic_0001>
module attributes {stable_mosaic.version = 11 : i64} {
  func.func @_gap_simple_kernel(%arg0: i32, %arg1: memref<8x256xf32, #tpu.memory_space<vmem>>, %arg2: memref<8x1xf32, #tpu.memory_space<vmem>>) attributes {dimension_semantics = [#tpu.dimension_semantics<parallel>], iteration_bounds = array<i64: 1>, scalar_prefetch = 0 : i64, scratch_operands = 0 : i64, tpu.core_type = #tpu.core_type<tc>, window_params = [{transform_indices = @transform_0, window_bounds = array<i64: 8, 256>}, {transform_indices = @transform_1, window_bounds = array<i64: 8, 1>}]} {
    %c0 = arith.constant 0 : index
    %c0_0 = arith.constant 0 : index
    %0 = vector.load %arg1[%c0, %c0_0] : memref<8x256xf32, #tpu.memory_space<vmem>>, vector<8x256xf32>
    %cst = arith.constant dense<0.000000e+00> : vector<8xf32>
    %1 = vector.multi_reduction <add>, %0, %cst [1] : vector<8x256xf32> to vector<8xf32>
    %2 = vector.shape_cast %1 : vector<8xf32> to vector<8x1xf32>
    %cst_1 = arith.constant 3.906250e-03 : f32
    %3 = vector.broadcast %cst_1 : f32 to vector<8x1xf32>
    %4 = arith.mulf %2, %3 : vector<8x1xf32>
    %c0_2 = arith.constant 0 : index
    %c0_3 = arith.constant 0 : index
    %5 = vector.load %arg2[%c0_2, %c0_3] : memref<8x1xf32, #tpu.memory_space<vmem>>, vector<8x1xf32>
    tpu.vector_store %arg2[%c0_2, %c0_3], %4 {strides = array<i32>} : memref<8x1xf32, #tpu.memory_space<vmem>>, vector<8x1xf32>,
    return
  }
  func.func @transform_0(%arg0: i32) -> (i32, i32) {
    %c0_i32 = arith.constant 0 : i32
    %c0_i32_0 = arith.constant 0 : i32
    return %arg0, %c0_i32 : i32, i32
  }
  func.func @transform_1(%arg0: i32) -> (i32, i32) {
    %c0_i32 = arith.constant 0 : i32
    %c0_i32_0 = arith.constant 0 : i32
    return %arg0, %c0_i32 : i32, i32
  }
}

</mosaic_0001>

<llo_original>
// kernel: tpu_custom_call.1
$region0: #{tpu_custom_call.1}
  #allocation0 [shape = 'u32[]', space=smem, size = 0x4, offset = 0x4, fixed_abs, tag = 'smem constant byte address 0x4 - core index']
  #allocation1 [shape = 'u32[144,128]{1,0:T(1,128)}', space=vmem, size = 0x12000, scoped, tag = 'internal scratch']
  %s0 = inlined_call_operand.hbm [shape: f32[8,256], index: 0, kind: input, shape index: {}]
  %s1 = inlined_call_operand.vmem [shape: f32[8,1], index: 1, kind: output, shape index: {}]
  %s2 = sld [smem:[#allocation0]]
  $region18: #{tpu_custom_call.1} parent=0
    _
  %s4 = ssub.s32 1, %s2
  %s5 = scalar_select 0, %s4, %s2
  $region1: #{tpu_custom_call.1} parent=0
    #allocation2 [shape = 'u8[8192]{0}', space=vmem, size = 0x2000, scoped, tag = 'input window, operand 0, single buffered']
    #allocation3 [shape = 's32[1]{0}', space=sflag, size = 0x4, scoped, tag = 'scoped memory for tpu_custom_call.1']
    %6 = vsyncpa [#allocation3], 0
    // Predicated region
    $region2: #{tpu_custom_call.1} parent=1 // pred_check
      _
    $region3: #{tpu_custom_call.1} parent=1 // pred_check_branch
      %8 = sbr.rel (0) target = $region5
    $region4: #{tpu_custom_call.1} parent=1 // pred_region
      %s10 = ssub.s32 256, 256
      %11 = vsyncadd [#allocation3], %s10
      %s13 = sshll.u32 [#allocation2], 4
      %s14 = int_to_ptr.vmem [resolvable:$true] %s13
      %16 = dma.hbm_to_vmem [thread:$0]  %s0, 256, %s14, [#allocation3]
    $region5: #{tpu_custom_call.1} parent=1 // pred_fallthru
      _
    // Predicated region
    $region6: #{tpu_custom_call.1} parent=1 // pred_check
      _
    $region7: #{tpu_custom_call.1} parent=1 // pred_check_branch
      %18 = sbr.rel (0) target = $region9
    $region8: #{tpu_custom_call.1} parent=1 // pred_region
      %19 = dma.done [#allocation3], 256
    $region9: #{tpu_custom_call.1} parent=1 // pred_fallthru
      _
    %v20 = vld [vmem:[#allocation2] sm:$0xff]
    %v21 = vld [vmem:[#allocation2 + $0x8] sm:$0xff]
    %v22 = vadd.f32 %v20, %v21
    %23 = vadd.xlane.f32.xlu0 %v22
    %v24 = vpop.xlane.xlu0 %23
    %v25 = vmul.f32 %v24, 0.00390625
    %vm26 = vcmask 7168
    %27 = vst.msk [vmem:[%s1] sm:$0xff] %vm26, %v25
    // Predicated region
    $region10: #{tpu_custom_call.1} parent=1 // pred_check
      _
    $region11: #{tpu_custom_call.1} parent=1 // pred_check_branch
      %29 = sbr.rel (0) target = $region13
    $region12: #{tpu_custom_call.1} parent=1 // pred_region
      _
    $region13: #{tpu_custom_call.1} parent=1 // pred_fallthru
      _
    // Predicated region
    $region14: #{tpu_custom_call.1} parent=1 // pred_check
      _
    $region15: #{tpu_custom_call.1} parent=1 // pred_check_branch
      %31 = sbr.rel (0) target = $region17
    $region16: #{tpu_custom_call.1} parent=1 // pred_region
      _
    $region17: #{tpu_custom_call.1} parent=1 // pred_fallthru
      _
    %32 = vsyncpa [#allocation3], 1

</llo_original>
